<compile_context>
chip_gen: v5e
topology: v5e:2x2
jax: 0.10.0
libtpu: 0.0.40
codegen_flags: <defaults>
</compile_context>

<pallas_src>
import functools

import jax
import jax.numpy as jnp
from jax.experimental import pallas as pl
from jax.experimental.pallas import tpu as pltpu

LANE = 128      # vreg lane width (last dim)
SUBLANE = 8     # vreg sublane count (second-to-last dim, f32)


def _round_up(n: int, m: int) -> int:
    return ((n + m - 1) // m) * m


def _cdiv(a: int, b: int) -> int:
    return -(-a // b)


# --------------------------------------------------------------------------
# Kernel: whole Linear(+act) chain fused in one body.  Intermediates live in
# vregs/VMEM only, never touching HBM.
# --------------------------------------------------------------------------
def _fused_mlp_kernel(x_ref, w0_ref, b0_ref, *rest, num_stacked, matmul_dtype):
    o_ref = rest[-1]

    # Layer 0: unpadded K (= real input feature dim), lane-dense N = Hp.
    y = jnp.dot(x_ref[...].astype(matmul_dtype), w0_ref[...],
                preferred_element_type=jnp.float32)
    y = y + b0_ref[...]                                   # (tile_b, Hp) + (1, Hp)

    if num_stacked:
        ws_ref, bs_ref = rest[0], rest[1]                 # (L-1,Hp,Hp), (L-1,1,Hp)
        y = jnp.clip(y, 0.0, 6.0)                         # ReLU6 after layer 0
        for j in range(num_stacked):                      # static unrolled chain
            y = jnp.dot(y.astype(matmul_dtype), ws_ref[j],
                        preferred_element_type=jnp.float32)
            y = y + bs_ref[j]
            if j < num_stacked - 1:
                y = jnp.clip(y, 0.0, 6.0)                 # ReLU6 on hidden layers

    o_ref[...] = jnp.tanh(y).astype(o_ref.dtype)          # final Tanh (EUP)


# --------------------------------------------------------------------------
# Parameter init (matches nn.Linear default init) + one-time layout prep.
# --------------------------------------------------------------------------
def init_generator_params(key, dims):
    """Unpadded params: W stored as (in, out), b as (1, out),
    uniform(-1/sqrt(fan_in), 1/sqrt(fan_in))."""
    params = []
    for i in range(len(dims) - 1):
        key, kw, kb = jax.random.split(key, 3)
        bound = 1.0 / jnp.sqrt(dims[i])
        w = jax.random.uniform(kw, (dims[i], dims[i + 1]),
                               minval=-bound, maxval=bound, dtype=jnp.float32)
        b = jax.random.uniform(kb, (1, dims[i + 1]),
                               minval=-bound, maxval=bound, dtype=jnp.float32)
        params.append((w, b))
    return params


def prepare_generator_params(params, *, matmul_dtype=jnp.float32):
    """One-time padding + stacking.

    Every hidden/output feature dim is zero-padded to one uniform lane-dense
    width Hp (multiple of 128) so layers 1..L-1 stack into a single
    (L-1, Hp, Hp) tensor.  Layer 0 keeps its REAL input dim (no wrapper-side
    x pad needed).  Padded lanes stay exactly zero through ReLU6/tanh.
    Weights stored in `matmul_dtype` (bf16 on v6e/v7x); biases stay f32.
    """
    num_layers = len(params)
    d_in = params[0][0].shape[0]
    hp = max(_round_up(w.shape[1], LANE) for (w, _) in params)

    w0, b0 = params[0]
    w0_p = jnp.zeros((d_in, hp), matmul_dtype).at[:, :w0.shape[1]].set(
        w0.astype(matmul_dtype))
    b0_p = jnp.zeros((1, hp), jnp.float32).at[:, :b0.shape[1]].set(b0)

    if num_layers > 1:
        ws, bs = [], []
        for (w, b) in params[1:]:
            wp = jnp.zeros((hp, hp), matmul_dtype).at[:w.shape[0], :w.shape[1]].set(
                w.astype(matmul_dtype))
            bp = jnp.zeros((1, hp), jnp.float32).at[:, :b.shape[1]].set(b)
            ws.append(wp)
            bs.append(bp)
        w_stack = jnp.stack(ws)            # (L-1, Hp, Hp)
        b_stack = jnp.stack(bs)            # (L-1, 1, Hp)
    else:
        w_stack = b_stack = None

    return dict(w0=w0_p, b0=b0_p, w_stack=w_stack, b_stack=b_stack,
                num_stacked=num_layers - 1, matmul_dtype=matmul_dtype,
                d_in=d_in, d_out=params[-1][0].shape[1], d_out_pad=hp)


# --------------------------------------------------------------------------
# pallas_call wrapper.
# --------------------------------------------------------------------------
def _call_fused(x_in, p, *, tile_b, n_steps, resident_mode, dim_sem):
    hp = p["d_out_pad"]
    num_stacked = p["num_stacked"]
    kernel = functools.partial(_fused_mlp_kernel, num_stacked=num_stacked,
                               matmul_dtype=p["matmul_dtype"])

    def resident_spec(arr):
        nd = arr.ndim
        idx = lambda i, nd=nd: (0,) * nd          # constant -> weights stay resident
        if resident_mode is None:
            return pl.BlockSpec(arr.shape, idx)
        return pl.BlockSpec(arr.shape, idx, pipeline_mode=resident_mode)

    in_specs = [pl.BlockSpec((tile_b, x_in.shape[1]), lambda i: (i, 0)),
                resident_spec(p["w0"]), resident_spec(p["b0"])]
    inputs = [x_in, p["w0"], p["b0"]]
    if num_stacked:
        in_specs += [resident_spec(p["w_stack"]), resident_spec(p["b_stack"])]
        inputs += [p["w_stack"], p["b_stack"]]

    return pl.pallas_call(
        kernel,
        out_shape=jax.ShapeDtypeStruct((x_in.shape[0], hp), jnp.float32),
        grid=(n_steps,),
        in_specs=in_specs,
        out_specs=pl.BlockSpec((tile_b, hp), lambda i: (i, 0)),
        compiler_params=pltpu.CompilerParams(dimension_semantics=dim_sem),
    )(*inputs)


def generator_forward(prepped, x, *, tile_b_max=1024):
    """Generator.forward as a single fused pallas_call over a batch grid.

    Returns the lane-dense (B, Hp) output; real columns are [:, :d_out]
    (padded columns are exactly tanh(0) = 0) -- consumer slices lazily.
    """
    B, d_in = x.shape
    assert d_in == prepped["d_in"], (d_in, prepped["d_in"])

    # Tile selection: bound batch-padding waste to < SUBLANE rows per step.
    n_steps = max(1, _cdiv(B, tile_b_max))
    tile_b = _round_up(_cdiv(B, n_steps), SUBLANE)
    b_pad = n_steps * tile_b
    x_in = x if b_pad == B else jnp.zeros((b_pad, d_in), x.dtype).at[:B].set(x)

    # Dimension semantics: CORE_PARALLEL on v7x with a multi-step grid so both
    # TensorCores run; plain "parallel" otherwise.
    kind = jax.devices()[0].device_kind.lower()
    dim_sem_pref = ("parallel",)
    if n_steps >= 2 and "v7" in kind:
        dim_sem_pref = (pltpu.CORE_PARALLEL,)

    buffered = getattr(pl, "Buffered", None)
    attempts = []
    if buffered is not None:
        attempts.append(dict(resident_mode=buffered(1), dim_sem=dim_sem_pref))
        if dim_sem_pref != ("parallel",):
            attempts.append(dict(resident_mode=buffered(1), dim_sem=("parallel",)))
    attempts.append(dict(resident_mode=None, dim_sem=("parallel",)))

    out_pad, last_err = None, None
    for cfg in attempts:
        try:
            out_pad = _call_fused(x_in, prepped, tile_b=tile_b, n_steps=n_steps, **cfg)
            break
        except Exception as e:      # fall back to a conservative config
            last_err = e
    if out_pad is None:
        raise last_err

    return out_pad if b_pad == B else out_pad[:B]


def generator_reference(params, x):
    """Pure-JAX f32 reference (unpadded params) for correctness check."""
    out = x
    for (w, b) in params[:-1]:
        out = jnp.clip(out @ w + b, 0.0, 6.0)
    w, b = params[-1]
    return jnp.tanh(out @ w + b)


if __name__ == "__main__":
    dims = [32, 64, 48, 16]   # 2 hidden Gdense layers + final Linear + Tanh
    batch = 8

    key = jax.random.PRNGKey(0)
    key, kx = jax.random.split(key)
    x = jax.random.normal(kx, (batch, dims[0]), dtype=jnp.float32)

    params = init_generator_params(key, dims)

    # bf16 matmul inputs on v6e/v7x (256x256 bf16 MXU); pure f32 on v5e/unknown.
    kind = jax.devices()[0].device_kind.lower()
    use_bf16 = ("v6" in kind) or ("v7" in kind)
    matmul_dtype = jnp.bfloat16 if use_bf16 else jnp.float32

    prepped = prepare_generator_params(params, matmul_dtype=matmul_dtype)

    out_full = generator_forward(prepped, x)          # lane-dense (B, Hp)
    out_full = jax.block_until_ready(out_full)
    out = out_full[:, :dims[-1]]                      # consumer-side lazy slice

    ref = generator_reference(params, x)
    tol = 1e-5 if matmul_dtype == jnp.float32 else 5e-2   # bf16 re-baselined tol
    assert out_full.shape == (batch, prepped["d_out_pad"]), out_full.shape
    assert out.shape == (batch, dims[-1]), out.shape
    assert jnp.allclose(out, ref, atol=tol, rtol=tol), "mismatch vs reference"
    # Padded output lanes must be (numerically) tanh(0) = 0.
    assert float(jnp.max(jnp.abs(out_full[:, dims[-1]:]))) < 1e-6

    print("KERNEL_OK")
</pallas_src>

<mosaic_0001>
module attributes {stable_mosaic.version = 11 : i64} {
  func.func @_fused_mlp_kernel(%arg0: i32, %arg1: memref<8x32xf32, #tpu.memory_space<vmem>>, %arg2: memref<32x128xf32, #tpu.memory_space<vmem>>, %arg3: memref<1x128xf32, #tpu.memory_space<vmem>>, %arg4: memref<2x128x128xf32, #tpu.memory_space<vmem>>, %arg5: memref<2x1x128xf32, #tpu.memory_space<vmem>>, %arg6: memref<8x128xf32, #tpu.memory_space<vmem>>) attributes {dimension_semantics = [#tpu.dimension_semantics<parallel>], iteration_bounds = array<i64: 1>, scalar_prefetch = 0 : i64, scratch_operands = 0 : i64, tpu.core_type = #tpu.core_type<tc>, window_params = [{transform_indices = @transform_0, window_bounds = array<i64: 8, 32>}, {pipeline_mode = #tpu.pipeline_mode<synchronous>, transform_indices = @transform_1, window_bounds = array<i64: 32, 128>}, {pipeline_mode = #tpu.pipeline_mode<synchronous>, transform_indices = @transform_2, window_bounds = array<i64: 1, 128>}, {pipeline_mode = #tpu.pipeline_mode<synchronous>, transform_indices = @transform_3, window_bounds = array<i64: 2, 128, 128>}, {pipeline_mode = #tpu.pipeline_mode<synchronous>, transform_indices = @transform_4, window_bounds = array<i64: 2, 1, 128>}, {transform_indices = @transform_5, window_bounds = array<i64: 8, 128>}]} {
    %c0 = arith.constant 0 : index
    %c0_0 = arith.constant 0 : index
    %0 = vector.load %arg1[%c0, %c0_0] : memref<8x32xf32, #tpu.memory_space<vmem>>, vector<8x32xf32>
    %c0_1 = arith.constant 0 : index
    %c0_2 = arith.constant 0 : index
    %1 = vector.load %arg2[%c0_1, %c0_2] : memref<32x128xf32, #tpu.memory_space<vmem>>, vector<32x128xf32>
    %cst = arith.constant dense<0.000000e+00> : vector<8x128xf32>
    %2 = tpu.matmul %0, %1, %cst {dimension_numbers = #tpu.dot_dimension_numbers<[1], [0], [0], [1], [0, 0, 1, 1], [], []>} : vector<8x32xf32>, vector<32x128xf32>, vector<8x128xf32> -> vector<8x128xf32>
    %c0_3 = arith.constant 0 : index
    %c0_4 = arith.constant 0 : index
    %3 = vector.load %arg3[%c0_3, %c0_4] : memref<1x128xf32, #tpu.memory_space<vmem>>, vector<1x128xf32>
    %4 = vector.broadcast %3 : vector<1x128xf32> to vector<8x128xf32>
    %5 = arith.addf %2, %4 : vector<8x128xf32>
    %cst_5 = arith.constant 0.000000e+00 : f32
    %cst_6 = arith.constant 6.000000e+00 : f32
    %6 = vector.broadcast %cst_5 : f32 to vector<8x128xf32>
    %7 = arith.maximumf %6, %5 : vector<8x128xf32>
    %8 = vector.broadcast %cst_6 : f32 to vector<8x128xf32>
    %9 = arith.minimumf %8, %7 : vector<8x128xf32>
    %c0_7 = arith.constant 0 : index
    %c0_8 = arith.constant 0 : index
    %c0_9 = arith.constant 0 : index
    %10 = vector.load %arg4[%c0_7, %c0_8, %c0_9] : memref<2x128x128xf32, #tpu.memory_space<vmem>>, vector<1x128x128xf32>
    %11 = vector.shape_cast %10 : vector<1x128x128xf32> to vector<128x128xf32>
    %cst_10 = arith.constant dense<0.000000e+00> : vector<8x128xf32>
    %12 = tpu.matmul %9, %11, %cst_10 {dimension_numbers = #tpu.dot_dimension_numbers<[1], [0], [0], [1], [0, 0, 1, 1], [], []>} : vector<8x128xf32>, vector<128x128xf32>, vector<8x128xf32> -> vector<8x128xf32>
    %c0_11 = arith.constant 0 : index
    %c0_12 = arith.constant 0 : index
    %c0_13 = arith.constant 0 : index
    %13 = vector.load %arg5[%c0_11, %c0_12, %c0_13] : memref<2x1x128xf32, #tpu.memory_space<vmem>>, vector<1x1x128xf32>
    %14 = vector.shape_cast %13 : vector<1x1x128xf32> to vector<1x128xf32>
    %15 = vector.broadcast %14 : vector<1x128xf32> to vector<8x128xf32>
    %16 = arith.addf %12, %15 : vector<8x128xf32>
    %cst_14 = arith.constant 0.000000e+00 : f32
    %cst_15 = arith.constant 6.000000e+00 : f32
    %17 = vector.broadcast %cst_14 : f32 to vector<8x128xf32>
    %18 = arith.maximumf %17, %16 : vector<8x128xf32>
    %19 = vector.broadcast %cst_15 : f32 to vector<8x128xf32>
    %20 = arith.minimumf %19, %18 : vector<8x128xf32>
    %c1 = arith.constant 1 : index
    %c0_16 = arith.constant 0 : index
    %c0_17 = arith.constant 0 : index
    %21 = vector.load %arg4[%c1, %c0_16, %c0_17] : memref<2x128x128xf32, #tpu.memory_space<vmem>>, vector<1x128x128xf32>
    %22 = vector.shape_cast %21 : vector<1x128x128xf32> to vector<128x128xf32>
    %cst_18 = arith.constant dense<0.000000e+00> : vector<8x128xf32>
    %23 = tpu.matmul %20, %22, %cst_18 {dimension_numbers = #tpu.dot_dimension_numbers<[1], [0], [0], [1], [0, 0, 1, 1], [], []>} : vector<8x128xf32>, vector<128x128xf32>, vector<8x128xf32> -> vector<8x128xf32>
    %c1_19 = arith.constant 1 : index
    %c0_20 = arith.constant 0 : index
    %c0_21 = arith.constant 0 : index
    %24 = vector.load %arg5[%c1_19, %c0_20, %c0_21] : memref<2x1x128xf32, #tpu.memory_space<vmem>>, vector<1x1x128xf32>
    %25 = vector.shape_cast %24 : vector<1x1x128xf32> to vector<1x128xf32>
    %26 = vector.broadcast %25 : vector<1x128xf32> to vector<8x128xf32>
    %27 = arith.addf %23, %26 : vector<8x128xf32>
    %28 = math.tanh %27 : vector<8x128xf32>
    %c0_22 = arith.constant 0 : index
    %c0_23 = arith.constant 0 : index
    %29 = vector.load %arg6[%c0_22, %c0_23] : memref<8x128xf32, #tpu.memory_space<vmem>>, vector<8x128xf32>
    tpu.vector_store %arg6[%c0_22, %c0_23], %28 {strides = array<i32>} : memref<8x128xf32, #tpu.memory_space<vmem>>, vector<8x128xf32>,
    return
  }
  func.func @transform_0(%arg0: i32) -> (i32, i32) {
    %c0_i32 = arith.constant 0 : i32
    %c0_i32_0 = arith.constant 0 : i32
    return %arg0, %c0_i32 : i32, i32
  }
  func.func @transform_1(%arg0: i32) -> (i32, i32) {
    %c0_i32 = arith.constant 0 : i32
    %c0_i32_0 = arith.constant 0 : i32
    %c0_i32_1 = arith.constant 0 : i32
    return %c0_i32, %c0_i32_0 : i32, i32
  }
  func.func @transform_2(%arg0: i32) -> (i32, i32) {
    %c0_i32 = arith.constant 0 : i32
    %c0_i32_0 = arith.constant 0 : i32
    %c0_i32_1 = arith.constant 0 : i32
    return %c0_i32, %c0_i32_0 : i32, i32
  }
  func.func @transform_3(%arg0: i32) -> (i32, i32, i32) {
    %c0_i32 = arith.constant 0 : i32
    %c0_i32_0 = arith.constant 0 : i32
    %c0_i32_1 = arith.constant 0 : i32
    %c0_i32_2 = arith.constant 0 : i32
    return %c0_i32, %c0_i32_0, %c0_i32_1 : i32, i32, i32
  }
  func.func @transform_4(%arg0: i32) -> (i32, i32, i32) {
    %c0_i32 = arith.constant 0 : i32
    %c0_i32_0 = arith.constant 0 : i32
    %c0_i32_1 = arith.constant 0 : i32
    %c0_i32_2 = arith.constant 0 : i32
    return %c0_i32, %c0_i32_0, %c0_i32_1 : i32, i32, i32
  }
  func.func @transform_5(%arg0: i32) -> (i32, i32) {
    %c0_i32 = arith.constant 0 : i32
    %c0_i32_0 = arith.constant 0 : i32
    return %arg0, %c0_i32 : i32, i32
  }
}

module attributes {stable_mosaic.version = 11 : i64} {
  func.func @_fused_mlp_kernel(%arg0: i32, %arg1: memref<8x32xf32, #tpu.memory_space<vmem>>, %arg2: memref<32x128xf32, #tpu.memory_space<vmem>>, %arg3: memref<1x128xf32, #tpu.memory_space<vmem>>, %arg4: memref<2x128x128xf32, #tpu.memory_space<vmem>>, %arg5: memref<2x1x128xf32, #tpu.memory_space<vmem>>, %arg6: memref<8x128xf32, #tpu.memory_space<vmem>>) attributes {dimension_semantics = [#tpu.dimension_semantics<parallel>], iteration_bounds = array<i64: 1>, scalar_prefetch = 0 : i64, scratch_operands = 0 : i64, tpu.core_type = #tpu.core_type<tc>, window_params = [{transform_indices = @transform_0, window_bounds = array<i64: 8, 32>}, {pipeline_mode = #tpu.pipeline_mode<synchronous>, transform_indices = @transform_1, window_bounds = array<i64: 32, 128>}, {pipeline_mode = #tpu.pipeline_mode<synchronous>, transform_indices = @transform_2, window_bounds = array<i64: 1, 128>}, {pipeline_mode = #tpu.pipeline_mode<synchronous>, transform_indices = @transform_3, window_bounds = array<i64: 2, 128, 128>}, {pipeline_mode = #tpu.pipeline_mode<synchronous>, transform_indices = @transform_4, window_bounds = array<i64: 2, 1, 128>}, {transform_indices = @transform_5, window_bounds = array<i64: 8, 128>}]} {
    %c0 = arith.constant 0 : index
    %c0_0 = arith.constant 0 : index
    %0 = vector.load %arg1[%c0, %c0_0] : memref<8x32xf32, #tpu.memory_space<vmem>>, vector<8x32xf32>
    %c0_1 = arith.constant 0 : index
    %c0_2 = arith.constant 0 : index
    %1 = vector.load %arg2[%c0_1, %c0_2] : memref<32x128xf32, #tpu.memory_space<vmem>>, vector<32x128xf32>
    %cst = arith.constant dense<0.000000e+00> : vector<8x128xf32>
    %2 = tpu.matmul %0, %1, %cst {dimension_numbers = #tpu.dot_dimension_numbers<[1], [0], [0], [1], [0, 0, 1, 1], [], []>} : vector<8x32xf32>, vector<32x128xf32>, vector<8x128xf32> -> vector<8x128xf32>
    %c0_3 = arith.constant 0 : index
    %c0_4 = arith.constant 0 : index
    %3 = vector.load %arg3[%c0_3, %c0_4] : memref<1x128xf32, #tpu.memory_space<vmem>>, vector<1x128xf32>
    %4 = vector.broadcast %3 : vector<1x128xf32> to vector<8x128xf32>
    %5 = arith.addf %2, %4 : vector<8x128xf32>
    %cst_5 = arith.constant 0.000000e+00 : f32
    %cst_6 = arith.constant 6.000000e+00 : f32
    %6 = vector.broadcast %cst_5 : f32 to vector<8x128xf32>
    %7 = arith.maximumf %6, %5 : vector<8x128xf32>
    %8 = vector.broadcast %cst_6 : f32 to vector<8x128xf32>
    %9 = arith.minimumf %8, %7 : vector<8x128xf32>
    %c0_7 = arith.constant 0 : index
    %c0_8 = arith.constant 0 : index
    %c0_9 = arith.constant 0 : index
    %10 = vector.load %arg4[%c0_7, %c0_8, %c0_9] : memref<2x128x128xf32, #tpu.memory_space<vmem>>, vector<1x128x128xf32>
    %11 = vector.shape_cast %10 : vector<1x128x128xf32> to vector<128x128xf32>
    %cst_10 = arith.constant dense<0.000000e+00> : vector<8x128xf32>
    %12 = tpu.matmul %9, %11, %cst_10 {dimension_numbers = #tpu.dot_dimension_numbers<[1], [0], [0], [1], [0, 0, 1, 1], [], []>} : vector<8x128xf32>, vector<128x128xf32>, vector<8x128xf32> -> vector<8x128xf32>
    %c0_11 = arith.constant 0 : index
    %c0_12 = arith.constant 0 : index
    %c0_13 = arith.constant 0 : index
    %13 = vector.load %arg5[%c0_11, %c0_12, %c0_13] : memref<2x1x128xf32, #tpu.memory_space<vmem>>, vector<1x1x128xf32>
    %14 = vector.shape_cast %13 : vector<1x1x128xf32> to vector<1x128xf32>
    %15 = vector.broadcast %14 : vector<1x128xf32> to vector<8x128xf32>
    %16 = arith.addf %12, %15 : vector<8x128xf32>
    %cst_14 = arith.constant 0.000000e+00 : f32
    %cst_15 = arith.constant 6.000000e+00 : f32
    %17 = vector.broadcast %cst_14 : f32 to vector<8x128xf32>
    %18 = arith.maximumf %17, %16 : vector<8x128xf32>
    %19 = vector.broadcast %cst_15 : f32 to vector<8x128xf32>
    %20 = arith.minimumf %19, %18 : vector<8x128xf32>
    %c1 = arith.constant 1 : index
    %c0_16 = arith.constant 0 : index
    %c0_17 = arith.constant 0 : index
    %21 = vector.load %arg4[%c1, %c0_16, %c0_17] : memref<2x128x128xf32, #tpu.memory_space<vmem>>, vector<1x128x128xf32>
    %22 = vector.shape_cast %21 : vector<1x128x128xf32> to vector<128x128xf32>
    %cst_18 = arith.constant dense<0.000000e+00> : vector<8x128xf32>
    %23 = tpu.matmul %20, %22, %cst_18 {dimension_numbers = #tpu.dot_dimension_numbers<[1], [0], [0], [1], [0, 0, 1, 1], [], []>} : vector<8x128xf32>, vector<128x128xf32>, vector<8x128xf32> -> vector<8x128xf32>
    %c1_19 = arith.constant 1 : index
    %c0_20 = arith.constant 0 : index
    %c0_21 = arith.constant 0 : index
    %24 = vector.load %arg5[%c1_19, %c0_20, %c0_21] : memref<2x1x128xf32, #tpu.memory_space<vmem>>, vector<1x1x128xf32>
    %25 = vector.shape_cast %24 : vector<1x1x128xf32> to vector<1x128xf32>
    %26 = vector.broadcast %25 : vector<1x128xf32> to vector<8x128xf32>
    %27 = arith.addf %23, %26 : vector<8x128xf32>
    %28 = math.tanh %27 : vector<8x128xf32>
    %c0_22 = arith.constant 0 : index
    %c0_23 = arith.constant 0 : index
    %29 = vector.load %arg6[%c0_22, %c0_23] : memref<8x128xf32, #tpu.memory_space<vmem>>, vector<8x128xf32>
    tpu.vector_store %arg6[%c0_22, %c0_23], %28 {strides = array<i32>} : memref<8x128xf32, #tpu.memory_space<vmem>>, vector<8x128xf32>,
    return
  }
  func.func @transform_0(%arg0: i32) -> (i32, i32) {
    %c0_i32 = arith.constant 0 : i32
    %c0_i32_0 = arith.constant 0 : i32
    return %arg0, %c0_i32 : i32, i32
  }
  func.func @transform_1(%arg0: i32) -> (i32, i32) {
    %c0_i32 = arith.constant 0 : i32
    %c0_i32_0 = arith.constant 0 : i32
    %c0_i32_1 = arith.constant 0 : i32
    return %c0_i32, %c0_i32_0 : i32, i32
  }
  func.func @transform_2(%arg0: i32) -> (i32, i32) {
    %c0_i32 = arith.constant 0 : i32
    %c0_i32_0 = arith.constant 0 : i32
    %c0_i32_1 = arith.constant 0 : i32
    return %c0_i32, %c0_i32_0 : i32, i32
  }
  func.func @transform_3(%arg0: i32) -> (i32, i32, i32) {
    %c0_i32 = arith.constant 0 : i32
    %c0_i32_0 = arith.constant 0 : i32
    %c0_i32_1 = arith.constant 0 : i32
    %c0_i32_2 = arith.constant 0 : i32
    return %c0_i32, %c0_i32_0, %c0_i32_1 : i32, i32, i32
  }
  func.func @transform_4(%arg0: i32) -> (i32, i32, i32) {
    %c0_i32 = arith.constant 0 : i32
    %c0_i32_0 = arith.constant 0 : i32
    %c0_i32_1 = arith.constant 0 : i32
    %c0_i32_2 = arith.constant 0 : i32
    return %c0_i32, %c0_i32_0, %c0_i32_1 : i32, i32, i32
  }
  func.func @transform_5(%arg0: i32) -> (i32, i32) {
    %c0_i32 = arith.constant 0 : i32
    %c0_i32_0 = arith.constant 0 : i32
    return %arg0, %c0_i32 : i32, i32
  }
}

</mosaic_0001>

<llo_original>
// kernel: tpu_custom_call.1
$region0: #{tpu_custom_call.1}
  #allocation0 [shape = 'u32[]', space=smem, size = 0x4, offset = 0x4, fixed_abs, tag = 'smem constant byte address 0x4 - core index']
  #allocation1 [shape = 'u32[72,128]{1,0:T(1,128)}', space=vmem, size = 0x9000, scoped, tag = 'internal scratch']
  %s0 = inlined_call_operand.hbm [shape: f32[8,32], index: 0, kind: input, shape index: {}]
  %s1 = inlined_call_operand.hbm [shape: f32[32,128], index: 1, kind: input, shape index: {}]
  %s2 = inlined_call_operand.vmem [shape: f32[1,128], index: 2, kind: input, shape index: {}]
  %s3 = inlined_call_operand.hbm [shape: f32[2,128,128], index: 3, kind: input, shape index: {}]
  %s4 = inlined_call_operand.vmem [shape: f32[2,1,128], index: 4, kind: input, shape index: {}]
  %s5 = inlined_call_operand.hbm [shape: f32[8,128], index: 5, kind: output, shape index: {}]
  %s6 = sld [smem:[#allocation0]]
  $region42: #{tpu_custom_call.1} parent=0
    _
  %s8 = ssub.s32 1, %s6
  %s9 = scalar_select 0, %s8, %s6
  $region1: #{tpu_custom_call.1} parent=0
    #allocation2 [shape = 'u8[4096]{0}', space=vmem, size = 0x1000, scoped, tag = 'input window, operand 0, single buffered']
    #allocation3 [shape = 's32[1]{0}', space=sflag, size = 0x4, scoped, tag = 'scoped memory for tpu_custom_call.1']
    #allocation4 [shape = 's32[1]{0}', space=sflag, size = 0x4, scoped, tag = 'scoped memory for tpu_custom_call.1']
    #allocation5 [shape = 'u8[16384]{0}', space=vmem, size = 0x4000, scoped, tag = 'input window, operand 1, single buffered']
    #allocation6 [shape = 's32[1]{0}', space=sflag, size = 0x4, scoped, tag = 'scoped memory for tpu_custom_call.1']
    #allocation7 [shape = 'u8[131072]{0}', space=vmem, size = 0x20000, scoped, tag = 'input window, operand 3, single buffered']
    #allocation8 [shape = 'u8[4096]{0}', space=vmem, size = 0x1000, scoped, tag = 'output window, operand 0, single buffered']
    %10 = vsyncpa [#allocation3], 0
    %11 = vsyncpa [#allocation6], 0
    %12 = vsyncpa [#allocation4], 0
    // Predicated region
    $region2: #{tpu_custom_call.1} parent=1 // pred_check
      _
    $region3: #{tpu_custom_call.1} parent=1 // pred_check_branch
      %14 = sbr.rel (0) target = $region5
    $region4: #{tpu_custom_call.1} parent=1 // pred_region
      %16 = vsyncadd [#allocation3], 0
      %s18 = sshll.u32 %s0, 4
      %s19 = int_to_ptr.hbm [resolvable:$true] %s18
      %s20 = sshll.u32 [#allocation2], 4
      %s21 = int_to_ptr.vmem [resolvable:$true] %s20
      %23 = dma.hbm_to_vmem [thread:$0]  %s19, 128, %s21, [#allocation3]
    $region5: #{tpu_custom_call.1} parent=1 // pred_fallthru
      _
    // Predicated region
    $region6: #{tpu_custom_call.1} parent=1 // pred_check
      _
    $region7: #{tpu_custom_call.1} parent=1 // pred_check_branch
      %25 = sbr.rel (0) target = $region9
    $region8: #{tpu_custom_call.1} parent=1 // pred_region
      %27 = vsyncadd [#allocation6], 0
      %s28 = sshll.u32 %s1, 4
      %s29 = int_to_ptr.hbm [resolvable:$true] %s28
      %s30 = sshll.u32 [#allocation5], 4
      %s31 = int_to_ptr.vmem [resolvable:$true] %s30
      %36 = dma.hbm_to_vmem [thread:$0]  %s29, 512, %s31, [#allocation6], 128, 128, 8
    $region9: #{tpu_custom_call.1} parent=1 // pred_fallthru
      _
    // Predicated region
    $region10: #{tpu_custom_call.1} parent=1 // pred_check
      _
    $region11: #{tpu_custom_call.1} parent=1 // pred_check_branch
      %38 = sbr.rel (0) target = $region13
    $region12: #{tpu_custom_call.1} parent=1 // pred_region
      _
    $region13: #{tpu_custom_call.1} parent=1 // pred_fallthru
      _
    // Predicated region
    $region14: #{tpu_custom_call.1} parent=1 // pred_check
      _
    $region15: #{tpu_custom_call.1} parent=1 // pred_check_branch
      %40 = sbr.rel (0) target = $region17
    $region16: #{tpu_custom_call.1} parent=1 // pred_region
      %42 = vsyncadd [#allocation6], 0
      %s43 = sshll.u32 %s3, 4
      %s44 = int_to_ptr.hbm [resolvable:$true] %s43
      %s45 = sshll.u32 [#allocation7], 4
      %s46 = int_to_ptr.vmem [resolvable:$true] %s45
      %51 = dma.hbm_to_vmem [thread:$0]  %s44, 4096, %s46, [#allocation6], 128, 128, 8
    $region17: #{tpu_custom_call.1} parent=1 // pred_fallthru
      _
    // Predicated region
    $region18: #{tpu_custom_call.1} parent=1 // pred_check
      _
    $region19: #{tpu_custom_call.1} parent=1 // pred_check_branch
      %53 = sbr.rel (0) target = $region21
    $region20: #{tpu_custom_call.1} parent=1 // pred_region
      _
    $region21: #{tpu_custom_call.1} parent=1 // pred_fallthru
      _
    // Predicated region
    $region22: #{tpu_custom_call.1} parent=1 // pred_check
      _
    $region23: #{tpu_custom_call.1} parent=1 // pred_check_branch
      %55 = sbr.rel (0) target = $region25
    $region24: #{tpu_custom_call.1} parent=1 // pred_region
      %57 = dma.done [#allocation3], 128
    $region25: #{tpu_custom_call.1} parent=1 // pred_fallthru
      _
    // Predicated region
    $region26: #{tpu_custom_call.1} parent=1 // pred_check
      _
    $region27: #{tpu_custom_call.1} parent=1 // pred_check_branch
      %59 = sbr.rel (0) target = $region29
    $region28: #{tpu_custom_call.1} parent=1 // pred_region
      %61 = dma.done [#allocation6], 512
    $region29: #{tpu_custom_call.1} parent=1 // pred_fallthru
      _
    // Predicated region
    $region30: #{tpu_custom_call.1} parent=1 // pred_check
      _
    $region31: #{tpu_custom_call.1} parent=1 // pred_check_branch
      %63 = sbr.rel (0) target = $region33
    $region32: #{tpu_custom_call.1} parent=1 // pred_region
      %65 = dma.done [#allocation6], 4096
    $region33: #{tpu_custom_call.1} parent=1 // pred_fallthru
      _
    %v66 = vld [vmem:[#allocation2] sm:$0xff]
    %v67 = vld [vmem:[#allocation5] sm:$0xff]
    %v68 = vld [vmem:[#allocation5 + $0x8] sm:$0xff]
    %v69 = vld [vmem:[#allocation5 + $0x10] sm:$0xff]
    %v70 = vld [vmem:[#allocation5 + $0x18] sm:$0xff]
    %v71 = vld [vmem:[%s2] sm:$0x1]
    %v73 = vperm.slane %v71, 0
    %vm75 = vcmask 261120
    %v77 = vsel %vm75, %v66, 0
    %79 = vmatpush.msra.mxu0 0.0
    %80 = vmatpush.msra.mxu0 0.0
    %81 = vmatpush.msra.mxu0 0.0
    %82 = vmatpush.msra.mxu0 0.0
    %83 = vmatpush.msra.mxu0 0.0
    %84 = vmatpush.msra.mxu0 0.0
    %85 = vmatpush.msra.mxu0 0.0
    %86 = vmatpush.msra.mxu0 0.0
    %87 = vmatpush.msra.mxu0 0.0
    %88 = vmatpush.msra.mxu0 0.0
    %89 = vmatpush.msra.mxu0 0.0
    %90 = vmatpush.msra.mxu0 0.0
    %91 = vmatpush.msra.mxu0 %v70
    %92 = vmatpush.msra.mxu0 %v69
    %93 = vmatpush.msra.mxu0 %v68
    %94 = vmatpush.msra.mxu0 %v67
    %95 = vmatmul.f32.gmra.mxu0 %v77
    %v96 = vpop.f32.mrf.mxu0
    %v97 = vadd.f32 %v73, %v96
    %98 = vdwg.mxu0
    %v99 = vmax.f32 %v97, 0.0
    %v100 = vmin.f32 %v99, 6.0
    %v101 = vld [vmem:[#allocation7] sm:$0xff]
    %v102 = vld [vmem:[#allocation7 + $0x8] sm:$0xff]
    %v103 = vld [vmem:[#allocation7 + $0x10] sm:$0xff]
    %v104 = vld [vmem:[#allocation7 + $0x18] sm:$0xff]
    %v105 = vld [vmem:[#allocation7 + $0x20] sm:$0xff]
    %v106 = vld [vmem:[#allocation7 + $0x28] sm:$0xff]
    %v107 = vld [vmem:[#allocation7 + $0x30] sm:$0xff]
    %v108 = vld [vmem:[#allocation7 + $0x38] sm:$0xff]
    %v109 = vld [vmem:[#allocation7 + $0x40] sm:$0xff]
    %v110 = vld [vmem:[#allocation7 + $0x48] sm:$0xff]
    %v111 = vld [vmem:[#allocation7 + $0x50] sm:$0xff]
    %v112 = vld [vmem:[#allocation7 + $0x58] sm:$0xff]
    %v113 = vld [vmem:[#allocation7 + $0x60] sm:$0xff]
    %v114 = vld [vmem:[#allocation7 + $0x68] sm:$0xff]
    %v115 = vld [vmem:[#allocation7 + $0x70] sm:$0xff]
    %v116 = vld [vmem:[#allocation7 + $0x78] sm:$0xff]
    %v117 = vld [vmem:[%s4] sm:$0x1]
    %v119 = vperm.slane %v117, 0
    %121 = vmatpush.msra.mxu0 %v116
    %122 = vmatpush.msra.mxu0 %v115
    %123 = vmatpush.msra.mxu0 %v114
    %124 = vmatpush.msra.mxu0 %v113
    %125 = vmatpush.msra.mxu0 %v112
    %126 = vmatpush.msra.mxu0 %v111
    %127 = vmatpush.msra.mxu0 %v110
    %128 = vmatpush.msra.mxu0 %v109
    %129 = vmatpush.msra.mxu0 %v108
    %130 = vmatpush.msra.mxu0 %v107
    %131 = vmatpush.msra.mxu0 %v106
    %132 = vmatpush.msra.mxu0 %v105
    %133 = vmatpush.msra.mxu0 %v104
    %134 = vmatpush.msra.mxu0 %v103
    %135 = vmatpush.msra.mxu0 %v102
    %136 = vmatpush.msra.mxu0 %v101
    %137 = vmatmul.f32.gmra.mxu0 %v100
    %v138 = vpop.f32.mrf.mxu0
    %v139 = vadd.f32 %v119, %v138
    %140 = vdwg.mxu0
    %v141 = vmax.f32 %v139, 0.0
    %v142 = vmin.f32 %v141, 6.0
    %s143 = scalar_lea.vmem [#allocation7], 128
    %v144 = vld [vmem:[%s143] sm:$0xff]
    %v145 = vld [vmem:[%s143 + $0x8] sm:$0xff]
    %v146 = vld [vmem:[%s143 + $0x10] sm:$0xff]
    %v147 = vld [vmem:[%s143 + $0x18] sm:$0xff]
    %v148 = vld [vmem:[%s143 + $0x20] sm:$0xff]
    %v149 = vld [vmem:[%s143 + $0x28] sm:$0xff]
    %v150 = vld [vmem:[%s143 + $0x30] sm:$0xff]
    %v151 = vld [vmem:[%s143 + $0x38] sm:$0xff]
    %v152 = vld [vmem:[%s143 + $0x40] sm:$0xff]
    %v153 = vld [vmem:[%s143 + $0x48] sm:$0xff]
    %v154 = vld [vmem:[%s143 + $0x50] sm:$0xff]
    %v155 = vld [vmem:[%s143 + $0x58] sm:$0xff]
    %v156 = vld [vmem:[%s143 + $0x60] sm:$0xff]
    %v157 = vld [vmem:[%s143 + $0x68] sm:$0xff]
    %v158 = vld [vmem:[%s143 + $0x70] sm:$0xff]
    %v159 = vld [vmem:[%s143 + $0x78] sm:$0xff]
    %s160 = scalar_lea.vmem %s4, 1
    %v161 = vld [vmem:[%s160] sm:$0x1]
    %v163 = vperm.slane %v161, 0
    %165 = vmatpush.msra.mxu0 %v159
    %166 = vmatpush.msra.mxu0 %v158
    %167 = vmatpush.msra.mxu0 %v157
    %168 = vmatpush.msra.mxu0 %v156
    %169 = vmatpush.msra.mxu0 %v155
    %170 = vmatpush.msra.mxu0 %v154
    %171 = vmatpush.msra.mxu0 %v153
    %172 = vmatpush.msra.mxu0 %v152
    %173 = vmatpush.msra.mxu0 %v151
    %174 = vmatpush.msra.mxu0 %v150
    %175 = vmatpush.msra.mxu0 %v149
    %176 = vmatpush.msra.mxu0 %v148
    %177 = vmatpush.msra.mxu0 %v147
    %178 = vmatpush.msra.mxu0 %v146
    %179 = vmatpush.msra.mxu0 %v145
    %180 = vmatpush.msra.mxu0 %v144
    %181 = vmatmul.f32.gmra.mxu0 %v142
    %v182 = vpop.f32.mrf.mxu0
    %v183 = vadd.f32 %v163, %v182
    %184 = vdwg.mxu0
    %v185 = vtanh.pop %v183
    %186 = vst [vmem:[#allocation8] sm:$0xff] %v185
    // Predicated region
    $region34: #{tpu_custom_call.1} parent=1 // pred_check
      _
    $region35: #{tpu_custom_call.1} parent=1 // pred_check_branch
      %188 = sbr.rel (0) target = $region37
    $region36: #{tpu_custom_call.1} parent=1 // pred_region
      %190 = vsyncadd [#allocation4], 0
      %s192 = sshll.u32 [#allocation8], 4
      %s193 = int_to_ptr.vmem [resolvable:$true] %s192
      %s194 = sshll.u32 %s5, 4
      %s195 = int_to_ptr.hbm [resolvable:$true] %s194
      %197 = dma.vmem_to_hbm [thread:$0]  %s193, 128, %s195, [#allocation4]
    $region37: #{tpu_custom_call.1} parent=1 // pred_fallthru
      _
    // Predicated region
    $region38: #{tpu_custom_call.1} parent=1 // pred_check
      _
    $region39: #{tpu_custom_call.1} parent=1 // pred_check_branch
      %199 = sbr.rel (0) target = $region41
    $region40: #{tpu_custom_call.1} parent=1 // pred_region
      %201 = dma.done [#allocation4], 128
    $region41: #{tpu_custom_call.1} parent=1 // pred_fallthru
      _
    %202 = vsyncpa [#allocation3], 1
    %203 = vsyncpa [#allocation6], 1
    %204 = vsyncpa [#allocation4], 1

// kernel: tpu_custom_call.1
$region0: #{tpu_custom_call.1}
  #allocation0 [shape = 'u32[]', space=smem, size = 0x4, offset = 0x4, fixed_abs, tag = 'smem constant byte address 0x4 - core index']
  #allocation1 [shape = 'u32[72,128]{1,0:T(1,128)}', space=vmem, size = 0x9000, scoped, tag = 'internal scratch']
  %s0 = inlined_call_operand.hbm [shape: f32[8,32], index: 0, kind: input, shape index: {}]
  %s1 = inlined_call_operand.hbm [shape: f32[32,128], index: 1, kind: input, shape index: {}]
  %s2 = inlined_call_operand.vmem [shape: f32[1,128], index: 2, kind: input, shape index: {}]
  %s3 = inlined_call_operand.hbm [shape: f32[2,128,128], index: 3, kind: input, shape index: {}]
  %s4 = inlined_call_operand.vmem [shape: f32[2,1,128], index: 4, kind: input, shape index: {}]
  %s5 = inlined_call_operand.hbm [shape: f32[8,128], index: 5, kind: output, shape index: {}]
  %s6 = sld [smem:[#allocation0]]
  $region42: #{tpu_custom_call.1} parent=0
    _
  %s8 = ssub.s32 1, %s6
  %s9 = scalar_select 0, %s8, %s6
  $region1: #{tpu_custom_call.1} parent=0
    #allocation2 [shape = 'u8[4096]{0}', space=vmem, size = 0x1000, scoped, tag = 'input window, operand 0, single buffered']
    #allocation3 [shape = 's32[1]{0}', space=sflag, size = 0x4, scoped, tag = 'scoped memory for tpu_custom_call.1']
    #allocation4 [shape = 's32[1]{0}', space=sflag, size = 0x4, scoped, tag = 'scoped memory for tpu_custom_call.1']
    #allocation5 [shape = 'u8[16384]{0}', space=vmem, size = 0x4000, scoped, tag = 'input window, operand 1, single buffered']
    #allocation6 [shape = 's32[1]{0}', space=sflag, size = 0x4, scoped, tag = 'scoped memory for tpu_custom_call.1']
    #allocation7 [shape = 'u8[131072]{0}', space=vmem, size = 0x20000, scoped, tag = 'input window, operand 3, single buffered']
    #allocation8 [shape = 'u8[4096]{0}', space=vmem, size = 0x1000, scoped, tag = 'output window, operand 0, single buffered']
    %10 = vsyncpa [#allocation3], 0
    %11 = vsyncpa [#allocation6], 0
    %12 = vsyncpa [#allocation4], 0
    // Predicated region
    $region2: #{tpu_custom_call.1} parent=1 // pred_check
      _
    $region3: #{tpu_custom_call.1} parent=1 // pred_check_branch
      %14 = sbr.rel (0) target = $region5
    $region4: #{tpu_custom_call.1} parent=1 // pred_region
      %16 = vsyncadd [#allocation3], 0
      %s18 = sshll.u32 %s0, 4
      %s19 = int_to_ptr.hbm [resolvable:$true] %s18
      %s20 = sshll.u32 [#allocation2], 4
      %s21 = int_to_ptr.vmem [resolvable:$true] %s20
      %23 = dma.hbm_to_vmem [thread:$0]  %s19, 128, %s21, [#allocation3]
    $region5: #{tpu_custom_call.1} parent=1 // pred_fallthru
      _
    // Predicated region
    $region6: #{tpu_custom_call.1} parent=1 // pred_check
      _
    $region7: #{tpu_custom_call.1} parent=1 // pred_check_branch
      %25 = sbr.rel (0) target = $region9
    $region8: #{tpu_custom_call.1} parent=1 // pred_region
      %27 = vsyncadd [#allocation6], 0
      %s28 = sshll.u32 %s1, 4
      %s29 = int_to_ptr.hbm [resolvable:$true] %s28
      %s30 = sshll.u32 [#allocation5], 4
      %s31 = int_to_ptr.vmem [resolvable:$true] %s30
      %36 = dma.hbm_to_vmem [thread:$0]  %s29, 512, %s31, [#allocation6], 128, 128, 8
    $region9: #{tpu_custom_call.1} parent=1 // pred_fallthru
      _
    // Predicated region
    $region10: #{tpu_custom_call.1} parent=1 // pred_check
      _
    $region11: #{tpu_custom_call.1} parent=1 // pred_check_branch
      %38 = sbr.rel (0) target = $region13
    $region12: #{tpu_custom_call.1} parent=1 // pred_region
      _
    $region13: #{tpu_custom_call.1} parent=1 // pred_fallthru
      _
    // Predicated region
    $region14: #{tpu_custom_call.1} parent=1 // pred_check
      _
    $region15: #{tpu_custom_call.1} parent=1 // pred_check_branch
      %40 = sbr.rel (0) target = $region17
    $region16: #{tpu_custom_call.1} parent=1 // pred_region
      %42 = vsyncadd [#allocation6], 0
      %s43 = sshll.u32 %s3, 4
      %s44 = int_to_ptr.hbm [resolvable:$true] %s43
      %s45 = sshll.u32 [#allocation7], 4
      %s46 = int_to_ptr.vmem [resolvable:$true] %s45
      %51 = dma.hbm_to_vmem [thread:$0]  %s44, 4096, %s46, [#allocation6], 128, 128, 8
    $region17: #{tpu_custom_call.1} parent=1 // pred_fallthru
      _
    // Predicated region
    $region18: #{tpu_custom_call.1} parent=1 // pred_check
      _
    $region19: #{tpu_custom_call.1} parent=1 // pred_check_branch
      %53 = sbr.rel (0) target = $region21
    $region20: #{tpu_custom_call.1} parent=1 // pred_region
      _
    $region21: #{tpu_custom_call.1} parent=1 // pred_fallthru
      _
    // Predicated region
    $region22: #{tpu_custom_call.1} parent=1 // pred_check
      _
    $region23: #{tpu_custom_call.1} parent=1 // pred_check_branch
      %55 = sbr.rel (0) target = $region25
    $region24: #{tpu_custom_call.1} parent=1 // pred_region
      %57 = dma.done [#allocation3], 128
    $region25: #{tpu_custom_call.1} parent=1 // pred_fallthru
      _
    // Predicated region
    $region26: #{tpu_custom_call.1} parent=1 // pred_check
      _
    $region27: #{tpu_custom_call.1} parent=1 // pred_check_branch
      %59 = sbr.rel (0) target = $region29
    $region28: #{tpu_custom_call.1} parent=1 // pred_region
      %61 = dma.done [#allocation6], 512
    $region29: #{tpu_custom_call.1} parent=1 // pred_fallthru
      _
    // Predicated region
    $region30: #{tpu_custom_call.1} parent=1 // pred_check
      _
    $region31: #{tpu_custom_call.1} parent=1 // pred_check_branch
      %63 = sbr.rel (0) target = $region33
    $region32: #{tpu_custom_call.1} parent=1 // pred_region
      %65 = dma.done [#allocation6], 4096
    $region33: #{tpu_custom_call.1} parent=1 // pred_fallthru
      _
    %v66 = vld [vmem:[#allocation2] sm:$0xff]
    %v67 = vld [vmem:[#allocation5] sm:$0xff]
    %v68 = vld [vmem:[#allocation5 + $0x8] sm:$0xff]
    %v69 = vld [vmem:[#allocation5 + $0x10] sm:$0xff]
    %v70 = vld [vmem:[#allocation5 + $0x18] sm:$0xff]
    %v71 = vld [vmem:[%s2] sm:$0x1]
    %v73 = vperm.slane %v71, 0
    %vm75 = vcmask 261120
    %v77 = vsel %vm75, %v66, 0
    %79 = vmatpush.msra.mxu0 0.0
    %80 = vmatpush.msra.mxu0 0.0
    %81 = vmatpush.msra.mxu0 0.0
    %82 = vmatpush.msra.mxu0 0.0
    %83 = vmatpush.msra.mxu0 0.0
    %84 = vmatpush.msra.mxu0 0.0
    %85 = vmatpush.msra.mxu0 0.0
    %86 = vmatpush.msra.mxu0 0.0
    %87 = vmatpush.msra.mxu0 0.0
    %88 = vmatpush.msra.mxu0 0.0
    %89 = vmatpush.msra.mxu0 0.0
    %90 = vmatpush.msra.mxu0 0.0
    %91 = vmatpush.msra.mxu0 %v70
    %92 = vmatpush.msra.mxu0 %v69
    %93 = vmatpush.msra.mxu0 %v68
    %94 = vmatpush.msra.mxu0 %v67
    %95 = vmatmul.f32.gmra.mxu0 %v77
    %v96 = vpop.f32.mrf.mxu0
    %v97 = vadd.f32 %v73, %v96
    %98 = vdwg.mxu0
    %v99 = vmax.f32 %v97, 0.0
    %v100 = vmin.f32 %v99, 6.0
    %v101 = vld [vmem:[#allocation7] sm:$0xff]
    %v102 = vld [vmem:[#allocation7 + $0x8] sm:$0xff]
    %v103 = vld [vmem:[#allocation7 + $0x10] sm:$0xff]
    %v104 = vld [vmem:[#allocation7 + $0x18] sm:$0xff]
    %v105 = vld [vmem:[#allocation7 + $0x20] sm:$0xff]
    %v106 = vld [vmem:[#allocation7 + $0x28] sm:$0xff]
    %v107 = vld [vmem:[#allocation7 + $0x30] sm:$0xff]
    %v108 = vld [vmem:[#allocation7 + $0x38] sm:$0xff]
    %v109 = vld [vmem:[#allocation7 + $0x40] sm:$0xff]
    %v110 = vld [vmem:[#allocation7 + $0x48] sm:$0xff]
    %v111 = vld [vmem:[#allocation7 + $0x50] sm:$0xff]
    %v112 = vld [vmem:[#allocation7 + $0x58] sm:$0xff]
    %v113 = vld [vmem:[#allocation7 + $0x60] sm:$0xff]
    %v114 = vld [vmem:[#allocation7 + $0x68] sm:$0xff]
    %v115 = vld [vmem:[#allocation7 + $0x70] sm:$0xff]
    %v116 = vld [vmem:[#allocation7 + $0x78] sm:$0xff]
    %v117 = vld [vmem:[%s4] sm:$0x1]
    %v119 = vperm.slane %v117, 0
    %121 = vmatpush.msra.mxu0 %v116
    %122 = vmatpush.msra.mxu0 %v115
    %123 = vmatpush.msra.mxu0 %v114
    %124 = vmatpush.msra.mxu0 %v113
    %125 = vmatpush.msra.mxu0 %v112
    %126 = vmatpush.msra.mxu0 %v111
    %127 = vmatpush.msra.mxu0 %v110
    %128 = vmatpush.msra.mxu0 %v109
    %129 = vmatpush.msra.mxu0 %v108
    %130 = vmatpush.msra.mxu0 %v107
    %131 = vmatpush.msra.mxu0 %v106
    %132 = vmatpush.msra.mxu0 %v105
    %133 = vmatpush.msra.mxu0 %v104
    %134 = vmatpush.msra.mxu0 %v103
    %135 = vmatpush.msra.mxu0 %v102
    %136 = vmatpush.msra.mxu0 %v101
    %137 = vmatmul.f32.gmra.mxu0 %v100
    %v138 = vpop.f32.mrf.mxu0
    %v139 = vadd.f32 %v119, %v138
    %140 = vdwg.mxu0
    %v141 = vmax.f32 %v139, 0.0
    %v142 = vmin.f32 %v141, 6.0
    %s143 = scalar_lea.vmem [#allocation7], 128
    %v144 = vld [vmem:[%s143] sm:$0xff]
    %v145 = vld [vmem:[%s143 + $0x8] sm:$0xff]
    %v146 = vld [vmem:[%s143 + $0x10] sm:$0xff]
    %v147 = vld [vmem:[%s143 + $0x18] sm:$0xff]
    %v148 = vld [vmem:[%s143 + $0x20] sm:$0xff]
    %v149 = vld [vmem:[%s143 + $0x28] sm:$0xff]
    %v150 = vld [vmem:[%s143 + $0x30] sm:$0xff]
    %v151 = vld [vmem:[%s143 + $0x38] sm:$0xff]
    %v152 = vld [vmem:[%s143 + $0x40] sm:$0xff]
    %v153 = vld [vmem:[%s143 + $0x48] sm:$0xff]
    %v154 = vld [vmem:[%s143 + $0x50] sm:$0xff]
    %v155 = vld [vmem:[%s143 + $0x58] sm:$0xff]
    %v156 = vld [vmem:[%s143 + $0x60] sm:$0xff]
    %v157 = vld [vmem:[%s143 + $0x68] sm:$0xff]
    %v158 = vld [vmem:[%s143 + $0x70] sm:$0xff]
    %v159 = vld [vmem:[%s143 + $0x78] sm:$0xff]
    %s160 = scalar_lea.vmem %s4, 1
    %v161 = vld [vmem:[%s160] sm:$0x1]
    %v163 = vperm.slane %v161, 0
    %165 = vmatpush.msra.mxu0 %v159
    %166 = vmatpush.msra.mxu0 %v158
    %167 = vmatpush.msra.mxu0 %v157
    %168 = vmatpush.msra.mxu0 %v156
    %169 = vmatpush.msra.mxu0 %v155
    %170 = vmatpush.msra.mxu0 %v154
    %171 = vmatpush.msra.mxu0 %v153
    %172 = vmatpush.msra.mxu0 %v152
    %173 = vmatpush.msra.mxu0 %v151
    %174 = vmatpush.msra.mxu0 %v150
    %175 = vmatpush.msra.mxu0 %v149
    %176 = vmatpush.msra.mxu0 %v148
    %177 = vmatpush.msra.mxu0 %v147
    %178 = vmatpush.msra.mxu0 %v146
    %179 = vmatpush.msra.mxu0 %v145
    %180 = vmatpush.msra.mxu0 %v144
    %181 = vmatmul.f32.gmra.mxu0 %v142
    %v182 = vpop.f32.mrf.mxu0
    %v183 = vadd.f32 %v163, %v182
    %184 = vdwg.mxu0
    %v185 = vtanh.pop %v183
    %186 = vst [vmem:[#allocation8] sm:$0xff] %v185
    // Predicated region
    $region34: #{tpu_custom_call.1} parent=1 // pred_check
      _
    $region35: #{tpu_custom_call.1} parent=1 // pred_check_branch
      %188 = sbr.rel (0) target = $region37
    $region36: #{tpu_custom_call.1} parent=1 // pred_region
      %190 = vsyncadd [#allocation4], 0
      %s192 = sshll.u32 [#allocation8], 4
      %s193 = int_to_ptr.vmem [resolvable:$true] %s192
      %s194 = sshll.u32 %s5, 4
      %s195 = int_to_ptr.hbm [resolvable:$true] %s194
      %197 = dma.vmem_to_hbm [thread:$0]  %s193, 128, %s195, [#allocation4]
    $region37: #{tpu_custom_call.1} parent=1 // pred_fallthru
      _
    // Predicated region
    $region38: #{tpu_custom_call.1} parent=1 // pred_check
      _
    $region39: #{tpu_custom_call.1} parent=1 // pred_check_branch
      %199 = sbr.rel (0) target = $region41
    $region40: #{tpu_custom_call.1} parent=1 // pred_region
      %201 = dma.done [#allocation4], 128
    $region41: #{tpu_custom_call.1} parent=1 // pred_fallthru
      _
    %202 = vsyncpa [#allocation3], 1
    %203 = vsyncpa [#allocation6], 1
    %204 = vsyncpa [#allocation4], 1

</llo_original>
